<compile_context>
chip_gen: v7x
topology: tpu7x:2x2x1
jax: 0.10.0
libtpu: 0.0.40
codegen_flags: <defaults>
</compile_context>

<pallas_src>
import functools

import jax
import jax.numpy as jnp
from jax.experimental import pallas as pl
from jax.experimental.pallas import tpu as pltpu

PARAMS = dict(
    DICT_SIZE=32,       # vocabulary size
    EMBED_DIM=16,       # embedding dim == conv "length" axis
    TOKEN_SIZE=8,       # tokens per sample == conv in_channels
    N_FILTER=4,         # conv out_channels
    FILTER_SIZE=3,      # conv kernel size
    STRIDE=1,
    PADDING=1,
    POOL_SIZE=2,
    N_HIDDEN_NODE=32,
)


def _round_up(a, b):
    return (a + b - 1) // b * b


def _tcnn_kernel(ids_ref, slab_ref, cb_ref, fw_ref, fb_ref, h_ref, *,
                 n_token, dict_size, pool, half):
    """One tile of B_TILE samples: one-hot embedding+conv matmul -> ReLU ->
    VPU max-pool -> fc.  All math in f32."""
    ids = ids_ref[...]                                   # (B_TILE, C) int32
    b_tile = ids.shape[0]
    cd = n_token * dict_size                             # 8 * 32 = 256 (MXU depth)

    # Multi-hot over token slots: slot c occupies columns [c*DICT, (c+1)*DICT).
    col = jax.lax.broadcasted_iota(jnp.int32, (b_tile, cd), 1)
    hot = None
    for c in range(n_token):
        band = (ids[:, c:c + 1] + c * dict_size) == col   # lane-broadcast compare (VPU)
        hot = band if hot is None else jnp.logical_or(hot, band)
    onehot = hot.astype(jnp.float32)

    # Embedding + Conv1d (all taps at once): (B_TILE, 256) @ (256, POOL*F*L_POOL).
    # Slab columns are pre-ordered by pooling phase / PyTorch flatten order.
    conv = jnp.dot(onehot, slab_ref[...], preferred_element_type=jnp.float32)
    conv = jnp.maximum(conv + cb_ref[...], 0.0)           # + bias, ReLU (VPU)

    # MaxPool1d on the VPU: phase-p taps live in contiguous column block p.
    pooled = conv[:, 0:half]
    for p in range(1, pool):
        pooled = jnp.maximum(pooled, conv[:, p * half:(p + 1) * half])

    # fc: single (B_TILE, F*L_POOL) @ (F*L_POOL, HID) matmul.
    h_ref[...] = jnp.dot(pooled, fw_ref[...],
                         preferred_element_type=jnp.float32) + fb_ref[...]


def prepare_weights(w, params=PARAMS):
    """One-time (per weight update) folding of emb + conv + pad + pool-reorder into a
    single matmul slab.  Depends only on the weights; hoist it out of the hot path."""
    C, E, F = params['TOKEN_SIZE'], params['EMBED_DIM'], params['N_FILTER']
    K, S, P = params['FILTER_SIZE'], params['STRIDE'], params['PADDING']
    POOL, HID = params['POOL_SIZE'], params['N_HIDDEN_NODE']
    DICT = params['DICT_SIZE']

    L_OUT = (E - K + 2 * P) // S + 1
    L_POOL = L_OUT // POOL
    Lpad = E + 2 * P
    HALF = F * L_POOL
    CONV_COLS = POOL * HALF

    emb_pad = jnp.pad(w['emb'].astype(jnp.float32), ((0, 0), (P, P)))   # (DICT, Lpad)
    # T[i, k, l] == 1 iff padded position i feeds (used) conv output position l via tap k
    l_idx = jnp.arange(L_POOL * POOL)
    T = (jnp.arange(Lpad)[:, None, None]
         == (l_idx[None, None, :] * S + jnp.arange(K)[None, :, None])).astype(jnp.float32)
    # slab4[c, v, f, l] = sum_k conv_w[f,c,k] * emb_pad[v, l*S + k]
    slab4 = jnp.einsum('fck,ikl,vi->cvfl', w['conv_w'].astype(jnp.float32), T, emb_pad)
    slab4 = slab4.reshape(C, DICT, F, L_POOL, POOL)                     # l = j*POOL + p
    slab = jnp.transpose(slab4, (0, 1, 4, 2, 3)).reshape(C * DICT, CONV_COLS)
    # column = p*HALF + f*L_POOL + j  (phase-major, then PyTorch flatten order)
    cb = jnp.tile(jnp.repeat(w['conv_b'].astype(jnp.float32), L_POOL),
                  POOL).reshape(1, CONV_COLS)

    fw = w['fc_w'].astype(jnp.float32).reshape(HALF, HID)
    fb = w['fc_b'].astype(jnp.float32).reshape(1, HID)
    out_w = w['out_w'].astype(jnp.float32).reshape(HID, 1)
    out_b = w['out_b'].astype(jnp.float32).reshape(1, 1)
    return dict(slab=slab, cb=cb, fw=fw, fb=fb, out_w=out_w, out_b=out_b)


def tcnn_forward(x, x_src, x_tar, pw, params=PARAMS, b_tile=1024):
    C = params['TOKEN_SIZE']
    DICT = params['DICT_SIZE']
    POOL = params['POOL_SIZE']

    slab, cb, fw, fb = pw['slab'], pw['cb'], pw['fw'], pw['fb']
    CD, CONV_COLS = slab.shape
    HALF, HID = fw.shape

    B = x.shape[0]
    N = 3 * B

    # Only the raw int32 ids go through HBM (32 B/sample).
    ids = jnp.concatenate([x, x_src, x_tar], axis=0).astype(jnp.int32)   # (N, C)

    # Batch tiling: one tile when small; otherwise an EVEN number of tiles so the
    # "parallel" grid axis splits evenly across dual-TensorCore chips (v7x / megacore).
    if N > b_tile:
        n_tiles = pl.cdiv(N, b_tile)
        n_tiles += n_tiles % 2
    else:
        n_tiles = 1
    B_TILE = max(8, _round_up(pl.cdiv(N, n_tiles), 8))
    N_pad = n_tiles * B_TILE
    if N_pad > N:
        ids = jnp.pad(ids, ((0, N_pad - N), (0, 0)))      # garbage rows, sliced off below

    kernel = functools.partial(_tcnn_kernel, n_token=C, dict_size=DICT,
                               pool=POOL, half=HALF)
    h_all = pl.pallas_call(
        kernel,
        grid=(n_tiles,),
        in_specs=[
            pl.BlockSpec((B_TILE, C), lambda n: (n, 0)),          # streamed ids
            pl.BlockSpec((CD, CONV_COLS), lambda n: (0, 0)),      # resident emb⊗conv slab
            pl.BlockSpec((1, CONV_COLS), lambda n: (0, 0)),
            pl.BlockSpec((HALF, HID), lambda n: (0, 0)),
            pl.BlockSpec((1, HID), lambda n: (0, 0)),
        ],
        out_specs=pl.BlockSpec((B_TILE, HID), lambda n: (n, 0)),
        out_shape=jax.ShapeDtypeStruct((N_pad, HID), jnp.float32),
        compiler_params=pltpu.CompilerParams(dimension_semantics=("parallel",)),
    )(ids, slab, cb, fw, fb)

    mmd = h_all[:N]
    x_mmd, src_mmd, tar_mmd = mmd[:B], mmd[B:2 * B], mmd[2 * B:3 * B]

    # out layer + sigmoid + round only on the rows whose scores are actually used.
    logit = x_mmd @ pw['out_w'] + pw['out_b']
    y_score = jax.nn.sigmoid(logit)
    y_pred = jnp.round(y_score)
    return (y_score, y_pred, x_mmd, src_mmd, tar_mmd)


def _reference(ids, w, params=PARAMS):
    """Pure-JAX reference of the same forward (for a sanity check)."""
    C, E, F = params['TOKEN_SIZE'], params['EMBED_DIM'], params['N_FILTER']
    K, P, POOL = params['FILTER_SIZE'], params['PADDING'], params['POOL_SIZE']
    S, HID = params['STRIDE'], params['N_HIDDEN_NODE']
    L_OUT = (E - K + 2 * P) // S + 1
    L_POOL = L_OUT // POOL
    b = ids.shape[0]
    emb = w['emb'][ids.astype(jnp.int32)]
    xpad = jnp.pad(emb, ((0, 0), (0, 0), (P, P)))
    conv = sum(jnp.einsum('bcl,fc->bfl', xpad[:, :, k:k + L_OUT], w['conv_w'][:, :, k])
               for k in range(K)) + w['conv_b'][None, :, None]
    a = jnp.maximum(conv, 0.0)
    pooled = a[:, :, :L_POOL * POOL].reshape(b, F, L_POOL, POOL).max(-1)
    h = pooled.reshape(b, F * L_POOL) @ w['fc_w'] + w['fc_b'][None, :]
    logit = h @ w['out_w'].reshape(HID, 1) + w['out_b'].reshape(1, 1)
    return h, 1.0 / (1.0 + jnp.exp(-logit))


if __name__ == "__main__":
    p = PARAMS
    B = 2
    new_dim = ((p['EMBED_DIM'] - p['FILTER_SIZE'] + 2 * p['PADDING']) // p['STRIDE'] + 1) \
        // p['POOL_SIZE']
    flat_dim = p['N_FILTER'] * new_dim

    key = jax.random.PRNGKey(0)
    ks = jax.random.split(key, 10)
    weights = {
        'emb': jax.random.normal(ks[0], (p['DICT_SIZE'], p['EMBED_DIM']), jnp.float32),
        'conv_w': 0.1 * jax.random.normal(
            ks[1], (p['N_FILTER'], p['TOKEN_SIZE'], p['FILTER_SIZE']), jnp.float32),
        'conv_b': 0.1 * jax.random.normal(ks[2], (p['N_FILTER'],), jnp.float32),
        # stored as (in_features, out_features); equals torch Linear weight transposed
        'fc_w': 0.1 * jax.random.normal(ks[3], (flat_dim, p['N_HIDDEN_NODE']), jnp.float32),
        'fc_b': 0.1 * jax.random.normal(ks[4], (p['N_HIDDEN_NODE'],), jnp.float32),
        'out_w': 0.1 * jax.random.normal(ks[5], (p['N_HIDDEN_NODE'],), jnp.float32),
        'out_b': 0.1 * jax.random.normal(ks[6], (1,), jnp.float32),
    }

    x = jax.random.randint(ks[7], (B, p['TOKEN_SIZE']), 0, p['DICT_SIZE'], jnp.int32)
    x_src = jax.random.randint(ks[8], (B, p['TOKEN_SIZE']), 0, p['DICT_SIZE'], jnp.int32)
    x_tar = jax.random.randint(ks[9], (B, p['TOKEN_SIZE']), 0, p['DICT_SIZE'], jnp.int32)

    prepped = prepare_weights(weights)          # one-time; cache in real use
    outs = tcnn_forward(x, x_src, x_tar, prepped)
    outs = jax.block_until_ready(outs)
    y_score, y_pred, x_mmd, src_mmd, tar_mmd = outs

    # numerical sanity check against a pure-JAX reference (kernel path is f32-exact)
    ref_h, ref_s = _reference(x, weights)
    ref_h_src, _ = _reference(x_src, weights)
    ref_h_tar, _ = _reference(x_tar, weights)
    assert jnp.allclose(x_mmd, ref_h, atol=2e-3, rtol=2e-3)
    assert jnp.allclose(src_mmd, ref_h_src, atol=2e-3, rtol=2e-3)
    assert jnp.allclose(tar_mmd, ref_h_tar, atol=2e-3, rtol=2e-3)
    assert jnp.allclose(y_score, ref_s, atol=2e-3, rtol=2e-3)
    assert y_score.shape == (B, 1) and y_pred.shape == (B, 1)
    assert x_mmd.shape == (B, p['N_HIDDEN_NODE'])
    assert src_mmd.shape == (B, p['N_HIDDEN_NODE'])
    assert tar_mmd.shape == (B, p['N_HIDDEN_NODE'])

    print("KERNEL_OK")
</pallas_src>

<mosaic_0001>
module attributes {stable_mosaic.version = 11 : i64} {
  func.func @_tcnn_kernel(%arg0: i32, %arg1: memref<8x8xi32, #tpu.memory_space<vmem>>, %arg2: memref<256x64xf32, #tpu.memory_space<vmem>>, %arg3: memref<1x64xf32, #tpu.memory_space<vmem>>, %arg4: memref<32x32xf32, #tpu.memory_space<vmem>>, %arg5: memref<1x32xf32, #tpu.memory_space<vmem>>, %arg6: memref<8x32xf32, #tpu.memory_space<vmem>>) attributes {dimension_semantics = [#tpu.dimension_semantics<parallel>], iteration_bounds = array<i64: 1>, scalar_prefetch = 0 : i64, scratch_operands = 0 : i64, tpu.core_type = #tpu.core_type<tc>, window_params = [{transform_indices = @transform_0, window_bounds = array<i64: 8, 8>}, {pipeline_mode = #tpu.pipeline_mode<synchronous>, transform_indices = @transform_1, window_bounds = array<i64: 256, 64>}, {pipeline_mode = #tpu.pipeline_mode<synchronous>, transform_indices = @transform_2, window_bounds = array<i64: 1, 64>}, {pipeline_mode = #tpu.pipeline_mode<synchronous>, transform_indices = @transform_3, window_bounds = array<i64: 32, 32>}, {pipeline_mode = #tpu.pipeline_mode<synchronous>, transform_indices = @transform_4, window_bounds = array<i64: 1, 32>}, {transform_indices = @transform_5, window_bounds = array<i64: 8, 32>}]} {
    %c0 = arith.constant 0 : index
    %c0_0 = arith.constant 0 : index
    %0 = vector.load %arg1[%c0, %c0_0] : memref<8x8xi32, #tpu.memory_space<vmem>>, vector<8x8xi32>
    %1 = tpu.iota {dimensions = array<i32: 1>} : vector<8x256xi32>
    %2 = vector.extract_strided_slice %0 {offsets = [0, 0], sizes = [8, 1], strides = [1, 1]} : vector<8x8xi32> to vector<8x1xi32>
    %c0_i32 = arith.constant 0 : i32
    %3 = vector.broadcast %c0_i32 : i32 to vector<8x1xi32>
    %4 = arith.addi %2, %3 : vector<8x1xi32>
    %5 = vector.broadcast %4 : vector<8x1xi32> to vector<8x256xi32>
    %6 = arith.cmpi eq, %5, %1 : vector<8x256xi32>
    %7 = vector.extract_strided_slice %0 {offsets = [0, 1], sizes = [8, 1], strides = [1, 1]} : vector<8x8xi32> to vector<8x1xi32>
    %c32_i32 = arith.constant 32 : i32
    %8 = vector.broadcast %c32_i32 : i32 to vector<8x1xi32>
    %9 = arith.addi %7, %8 : vector<8x1xi32>
    %10 = vector.broadcast %9 : vector<8x1xi32> to vector<8x256xi32>
    %11 = arith.cmpi eq, %10, %1 : vector<8x256xi32>
    %12 = arith.ori %6, %11 : vector<8x256xi1>
    %13 = vector.extract_strided_slice %0 {offsets = [0, 2], sizes = [8, 1], strides = [1, 1]} : vector<8x8xi32> to vector<8x1xi32>
    %c64_i32 = arith.constant 64 : i32
    %14 = vector.broadcast %c64_i32 : i32 to vector<8x1xi32>
    %15 = arith.addi %13, %14 : vector<8x1xi32>
    %16 = vector.broadcast %15 : vector<8x1xi32> to vector<8x256xi32>
    %17 = arith.cmpi eq, %16, %1 : vector<8x256xi32>
    %18 = arith.ori %12, %17 : vector<8x256xi1>
    %19 = vector.extract_strided_slice %0 {offsets = [0, 3], sizes = [8, 1], strides = [1, 1]} : vector<8x8xi32> to vector<8x1xi32>
    %c96_i32 = arith.constant 96 : i32
    %20 = vector.broadcast %c96_i32 : i32 to vector<8x1xi32>
    %21 = arith.addi %19, %20 : vector<8x1xi32>
    %22 = vector.broadcast %21 : vector<8x1xi32> to vector<8x256xi32>
    %23 = arith.cmpi eq, %22, %1 : vector<8x256xi32>
    %24 = arith.ori %18, %23 : vector<8x256xi1>
    %25 = vector.extract_strided_slice %0 {offsets = [0, 4], sizes = [8, 1], strides = [1, 1]} : vector<8x8xi32> to vector<8x1xi32>
    %c128_i32 = arith.constant 128 : i32
    %26 = vector.broadcast %c128_i32 : i32 to vector<8x1xi32>
    %27 = arith.addi %25, %26 : vector<8x1xi32>
    %28 = vector.broadcast %27 : vector<8x1xi32> to vector<8x256xi32>
    %29 = arith.cmpi eq, %28, %1 : vector<8x256xi32>
    %30 = arith.ori %24, %29 : vector<8x256xi1>
    %31 = vector.extract_strided_slice %0 {offsets = [0, 5], sizes = [8, 1], strides = [1, 1]} : vector<8x8xi32> to vector<8x1xi32>
    %c160_i32 = arith.constant 160 : i32
    %32 = vector.broadcast %c160_i32 : i32 to vector<8x1xi32>
    %33 = arith.addi %31, %32 : vector<8x1xi32>
    %34 = vector.broadcast %33 : vector<8x1xi32> to vector<8x256xi32>
    %35 = arith.cmpi eq, %34, %1 : vector<8x256xi32>
    %36 = arith.ori %30, %35 : vector<8x256xi1>
    %37 = vector.extract_strided_slice %0 {offsets = [0, 6], sizes = [8, 1], strides = [1, 1]} : vector<8x8xi32> to vector<8x1xi32>
    %c192_i32 = arith.constant 192 : i32
    %38 = vector.broadcast %c192_i32 : i32 to vector<8x1xi32>
    %39 = arith.addi %37, %38 : vector<8x1xi32>
    %40 = vector.broadcast %39 : vector<8x1xi32> to vector<8x256xi32>
    %41 = arith.cmpi eq, %40, %1 : vector<8x256xi32>
    %42 = arith.ori %36, %41 : vector<8x256xi1>
    %43 = vector.extract_strided_slice %0 {offsets = [0, 7], sizes = [8, 1], strides = [1, 1]} : vector<8x8xi32> to vector<8x1xi32>
    %c224_i32 = arith.constant 224 : i32
    %44 = vector.broadcast %c224_i32 : i32 to vector<8x1xi32>
    %45 = arith.addi %43, %44 : vector<8x1xi32>
    %46 = vector.broadcast %45 : vector<8x1xi32> to vector<8x256xi32>
    %47 = arith.cmpi eq, %46, %1 : vector<8x256xi32>
    %48 = arith.ori %42, %47 : vector<8x256xi1>
    %49 = arith.extui %48 : vector<8x256xi1> to vector<8x256xi32>
    %50 = arith.sitofp %49 : vector<8x256xi32> to vector<8x256xf32>
    %c0_1 = arith.constant 0 : index
    %c0_2 = arith.constant 0 : index
    %51 = vector.load %arg2[%c0_1, %c0_2] : memref<256x64xf32, #tpu.memory_space<vmem>>, vector<256x64xf32>
    %cst = arith.constant dense<0.000000e+00> : vector<8x64xf32>
    %52 = tpu.matmul %50, %51, %cst {dimension_numbers = #tpu.dot_dimension_numbers<[1], [0], [0], [1], [0, 0, 1, 1], [], []>} : vector<8x256xf32>, vector<256x64xf32>, vector<8x64xf32> -> vector<8x64xf32>
    %c0_3 = arith.constant 0 : index
    %c0_4 = arith.constant 0 : index
    %53 = vector.load %arg3[%c0_3, %c0_4] : memref<1x64xf32, #tpu.memory_space<vmem>>, vector<1x64xf32>
    %54 = vector.broadcast %53 : vector<1x64xf32> to vector<8x64xf32>
    %55 = arith.addf %52, %54 : vector<8x64xf32>
    %cst_5 = arith.constant 0.000000e+00 : f32
    %56 = vector.broadcast %cst_5 : f32 to vector<8x64xf32>
    %57 = arith.maximumf %55, %56 : vector<8x64xf32>
    %58 = vector.extract_strided_slice %57 {offsets = [0, 0], sizes = [8, 32], strides = [1, 1]} : vector<8x64xf32> to vector<8x32xf32>
    %59 = vector.extract_strided_slice %57 {offsets = [0, 32], sizes = [8, 32], strides = [1, 1]} : vector<8x64xf32> to vector<8x32xf32>
    %60 = arith.maximumf %58, %59 : vector<8x32xf32>
    %c0_6 = arith.constant 0 : index
    %c0_7 = arith.constant 0 : index
    %61 = vector.load %arg4[%c0_6, %c0_7] : memref<32x32xf32, #tpu.memory_space<vmem>>, vector<32x32xf32>
    %cst_8 = arith.constant dense<0.000000e+00> : vector<8x32xf32>
    %62 = tpu.matmul %60, %61, %cst_8 {dimension_numbers = #tpu.dot_dimension_numbers<[1], [0], [0], [1], [0, 0, 1, 1], [], []>} : vector<8x32xf32>, vector<32x32xf32>, vector<8x32xf32> -> vector<8x32xf32>
    %c0_9 = arith.constant 0 : index
    %c0_10 = arith.constant 0 : index
    %63 = vector.load %arg5[%c0_9, %c0_10] : memref<1x32xf32, #tpu.memory_space<vmem>>, vector<1x32xf32>
    %64 = vector.broadcast %63 : vector<1x32xf32> to vector<8x32xf32>
    %65 = arith.addf %62, %64 : vector<8x32xf32>
    %c0_11 = arith.constant 0 : index
    %c0_12 = arith.constant 0 : index
    %66 = vector.load %arg6[%c0_11, %c0_12] : memref<8x32xf32, #tpu.memory_space<vmem>>, vector<8x32xf32>
    tpu.vector_store %arg6[%c0_11, %c0_12], %65 {strides = array<i32>} : memref<8x32xf32, #tpu.memory_space<vmem>>, vector<8x32xf32>,
    return
  }
  func.func @transform_0(%arg0: i32) -> (i32, i32) {
    %c0_i32 = arith.constant 0 : i32
    %c0_i32_0 = arith.constant 0 : i32
    return %arg0, %c0_i32 : i32, i32
  }
  func.func @transform_1(%arg0: i32) -> (i32, i32) {
    %c0_i32 = arith.constant 0 : i32
    %c0_i32_0 = arith.constant 0 : i32
    %c0_i32_1 = arith.constant 0 : i32
    return %c0_i32, %c0_i32_0 : i32, i32
  }
  func.func @transform_2(%arg0: i32) -> (i32, i32) {
    %c0_i32 = arith.constant 0 : i32
    %c0_i32_0 = arith.constant 0 : i32
    %c0_i32_1 = arith.constant 0 : i32
    return %c0_i32, %c0_i32_0 : i32, i32
  }
  func.func @transform_3(%arg0: i32) -> (i32, i32) {
    %c0_i32 = arith.constant 0 : i32
    %c0_i32_0 = arith.constant 0 : i32
    %c0_i32_1 = arith.constant 0 : i32
    return %c0_i32, %c0_i32_0 : i32, i32
  }
  func.func @transform_4(%arg0: i32) -> (i32, i32) {
    %c0_i32 = arith.constant 0 : i32
    %c0_i32_0 = arith.constant 0 : i32
    %c0_i32_1 = arith.constant 0 : i32
    return %c0_i32, %c0_i32_0 : i32, i32
  }
  func.func @transform_5(%arg0: i32) -> (i32, i32) {
    %c0_i32 = arith.constant 0 : i32
    %c0_i32_0 = arith.constant 0 : i32
    return %arg0, %c0_i32 : i32, i32
  }
}

</mosaic_0001>

<llo_original>
// kernel: tpu_custom_call.1
$region0: #{tpu_custom_call.1}
  #allocation0 [shape = 'u32[]', space=smem, size = 0x4, offset = 0x4, fixed_abs, tag = 'smem constant byte address 0x4 - core index']
  #allocation1 [shape = 'u32[144,128]{1,0:T(1,128)}', space=vmem, size = 0x12000, scoped, tag = 'internal scratch']
  %s0 = inlined_call_operand.vmem [shape: s32[8,8], index: 0, kind: input, shape index: {}]
  %s1 = inlined_call_operand.vmem [shape: f32[256,64], index: 1, kind: input, shape index: {}]
  %s2 = inlined_call_operand.vmem [shape: f32[1,64], index: 2, kind: input, shape index: {}]
  %s3 = inlined_call_operand.vmem [shape: f32[32,32], index: 3, kind: input, shape index: {}]
  %s4 = inlined_call_operand.vmem [shape: f32[1,32], index: 4, kind: input, shape index: {}]
  %s5 = inlined_call_operand.hbm [shape: f32[8,32], index: 5, kind: output, shape index: {}]
  %s6 = sld [smem:[#allocation0]]
  $region30: #{tpu_custom_call.1} parent=0
    _
  %s8 = ssub.s32 1, %s6
  %s9 = scalar_select 0, %s8, %s6
  $region1: #{tpu_custom_call.1} parent=0
    #allocation2 [shape = 'u8[4096]{0}', space=vmem, size = 0x1000, scoped, tag = 'output window, operand 0, single buffered']
    #allocation3 [shape = 's32[1]{0}', space=sflag, size = 0x4, scoped, tag = 'scoped memory for tpu_custom_call.1']
    %10 = vsyncpa [#allocation3], 0
    // Predicated region
    $region2: #{tpu_custom_call.1} parent=1 // pred_check
      _
    $region3: #{tpu_custom_call.1} parent=1 // pred_check_branch
      %12 = sbr.rel (0) target = $region5
    $region4: #{tpu_custom_call.1} parent=1 // pred_region
      _
    $region5: #{tpu_custom_call.1} parent=1 // pred_fallthru
      _
    // Predicated region
    $region6: #{tpu_custom_call.1} parent=1 // pred_check
      _
    $region7: #{tpu_custom_call.1} parent=1 // pred_check_branch
      %14 = sbr.rel (0) target = $region9
    $region8: #{tpu_custom_call.1} parent=1 // pred_region
      _
    $region9: #{tpu_custom_call.1} parent=1 // pred_fallthru
      _
    // Predicated region
    $region10: #{tpu_custom_call.1} parent=1 // pred_check
      _
    $region11: #{tpu_custom_call.1} parent=1 // pred_check_branch
      %16 = sbr.rel (0) target = $region13
    $region12: #{tpu_custom_call.1} parent=1 // pred_region
      _
    $region13: #{tpu_custom_call.1} parent=1 // pred_fallthru
      _
    // Predicated region
    $region14: #{tpu_custom_call.1} parent=1 // pred_check
      _
    $region15: #{tpu_custom_call.1} parent=1 // pred_check_branch
      %18 = sbr.rel (0) target = $region17
    $region16: #{tpu_custom_call.1} parent=1 // pred_region
      _
    $region17: #{tpu_custom_call.1} parent=1 // pred_fallthru
      _
    // Predicated region
    $region18: #{tpu_custom_call.1} parent=1 // pred_check
      _
    $region19: #{tpu_custom_call.1} parent=1 // pred_check_branch
      %20 = sbr.rel (0) target = $region21
    $region20: #{tpu_custom_call.1} parent=1 // pred_region
      _
    $region21: #{tpu_custom_call.1} parent=1 // pred_fallthru
      _
    %v21 = vld [vmem:[%s0] sm:$0xff]
    %v22 = vlaneseq
    %v23 = vand.u32 %v22, 127
    %v24 = vadd.s32 %v23, 128
    %25 = vset.pattern.permute.xlu0 0
    %26 = vperm.xlu0 %25, %v21
    %v27 = vpop.permute.xlu0 %26
    %vm28 = vcmp.eq.s32.totalorder %v27, %v23
    %vm29 = vcmp.eq.s32.totalorder %v27, %v24
    %v30 = vadd.s32 %v21, 32
    %31 = vset.pattern.permute.xlu0 1
    %32 = vperm.xlu0 %31, %v30
    %v33 = vpop.permute.xlu0 %32
    %vm34 = vcmp.eq.s32.totalorder %v33, %v23
    %vm35 = vcmp.eq.s32.totalorder %v33, %v24
    %vm36 = vmor %vm28, %vm34
    %vm37 = vmor %vm29, %vm35
    %v38 = vadd.s32 %v21, 64
    %39 = vset.pattern.permute.xlu0 2
    %40 = vperm.xlu0 %39, %v38
    %v41 = vpop.permute.xlu0 %40
    %vm42 = vcmp.eq.s32.totalorder %v41, %v23
    %vm43 = vcmp.eq.s32.totalorder %v41, %v24
    %vm44 = vmor %vm36, %vm42
    %vm45 = vmor %vm37, %vm43
    %v46 = vadd.s32 %v21, 96
    %47 = vset.pattern.permute.xlu0 3
    %48 = vperm.xlu0 %47, %v46
    %v49 = vpop.permute.xlu0 %48
    %vm50 = vcmp.eq.s32.totalorder %v49, %v23
    %vm51 = vcmp.eq.s32.totalorder %v49, %v24
    %vm52 = vmor %vm44, %vm50
    %vm53 = vmor %vm45, %vm51
    %v54 = vadd.s32 %v21, 128
    %55 = vset.pattern.permute.xlu0 4
    %56 = vperm.xlu0 %55, %v54
    %v57 = vpop.permute.xlu0 %56
    %vm58 = vcmp.eq.s32.totalorder %v57, %v23
    %vm59 = vcmp.eq.s32.totalorder %v57, %v24
    %vm60 = vmor %vm52, %vm58
    %vm61 = vmor %vm53, %vm59
    %v62 = vadd.s32 %v21, 160
    %63 = vset.pattern.permute.xlu0 5
    %64 = vperm.xlu0 %63, %v62
    %v65 = vpop.permute.xlu0 %64
    %vm66 = vcmp.eq.s32.totalorder %v65, %v23
    %vm67 = vcmp.eq.s32.totalorder %v65, %v24
    %vm68 = vmor %vm60, %vm66
    %vm69 = vmor %vm61, %vm67
    %v70 = vadd.s32 %v21, 192
    %71 = vset.pattern.permute.xlu0 6
    %72 = vperm.xlu0 %71, %v70
    %v73 = vpop.permute.xlu0 %72
    %vm74 = vcmp.eq.s32.totalorder %v73, %v23
    %vm75 = vcmp.eq.s32.totalorder %v73, %v24
    %vm76 = vmor %vm68, %vm74
    %vm77 = vmor %vm69, %vm75
    %v78 = vadd.s32 %v21, 224
    %79 = vset.pattern.permute.xlu0 7
    %80 = vperm.xlu0 %79, %v78
    %v81 = vpop.permute.xlu0 %80
    %vm82 = vcmp.eq.s32.totalorder %v81, %v23
    %vm83 = vcmp.eq.s32.totalorder %v81, %v24
    %vm84 = vmor %vm76, %vm82
    %vm85 = vmor %vm77, %vm83
    %v86 = vsel %vm84, 1, 0
    %v87 = vsel %vm85, 1, 0
    %v88 = vcvt.s32.f32 %v86
    %v89 = vcvt.s32.f32 %v87
    %v90 = vld [vmem:[%s1] sm:$0xff]
    %v91 = vld [vmem:[%s1 + $0x8] sm:$0xff]
    %v92 = vld [vmem:[%s1 + $0x10] sm:$0xff]
    %v93 = vld [vmem:[%s1 + $0x18] sm:$0xff]
    %v94 = vld [vmem:[%s1 + $0x20] sm:$0xff]
    %v95 = vld [vmem:[%s1 + $0x28] sm:$0xff]
    %v96 = vld [vmem:[%s1 + $0x30] sm:$0xff]
    %v97 = vld [vmem:[%s1 + $0x38] sm:$0xff]
    %v98 = vld [vmem:[%s1 + $0x40] sm:$0xff]
    %v99 = vld [vmem:[%s1 + $0x48] sm:$0xff]
    %v100 = vld [vmem:[%s1 + $0x50] sm:$0xff]
    %v101 = vld [vmem:[%s1 + $0x58] sm:$0xff]
    %v102 = vld [vmem:[%s1 + $0x60] sm:$0xff]
    %v103 = vld [vmem:[%s1 + $0x68] sm:$0xff]
    %v104 = vld [vmem:[%s1 + $0x70] sm:$0xff]
    %v105 = vld [vmem:[%s1 + $0x78] sm:$0xff]
    %v106 = vld [vmem:[%s1 + $0x80] sm:$0xff]
    %v107 = vld [vmem:[%s1 + $0x88] sm:$0xff]
    %v108 = vld [vmem:[%s1 + $0x90] sm:$0xff]
    %v109 = vld [vmem:[%s1 + $0x98] sm:$0xff]
    %v110 = vld [vmem:[%s1 + $0xa0] sm:$0xff]
    %v111 = vld [vmem:[%s1 + $0xa8] sm:$0xff]
    %v112 = vld [vmem:[%s1 + $0xb0] sm:$0xff]
    %v113 = vld [vmem:[%s1 + $0xb8] sm:$0xff]
    %v114 = vld [vmem:[%s1 + $0xc0] sm:$0xff]
    %v115 = vld [vmem:[%s1 + $0xc8] sm:$0xff]
    %v116 = vld [vmem:[%s1 + $0xd0] sm:$0xff]
    %v117 = vld [vmem:[%s1 + $0xd8] sm:$0xff]
    %v118 = vld [vmem:[%s1 + $0xe0] sm:$0xff]
    %v119 = vld [vmem:[%s1 + $0xe8] sm:$0xff]
    %v120 = vld [vmem:[%s1 + $0xf0] sm:$0xff]
    %v121 = vld [vmem:[%s1 + $0xf8] sm:$0xff]
    %v122 = vld [vmem:[%s2] sm:$0x1]
    %v124 = vlaneseq
    %v125 = vshrl.u32 %v124, 7
    %v126 = vsub.s32 0, %v125
    %v127 = vrot.slane %v122, %v126
    %129 = vmatprep.subr.mxu0 0.0
    %130 = vmatpush1.msra.mxu0 %v90
    %131 = vmatprep.subr.mxu0 0.0
    %132 = vmatpush1.msra.mxu0 %v91
    %133 = vmatprep.subr.mxu0 0.0
    %134 = vmatpush1.msra.mxu0 %v92
    %135 = vmatprep.subr.mxu0 0.0
    %136 = vmatpush1.msra.mxu0 %v93
    %137 = vmatprep.subr.mxu0 0.0
    %138 = vmatpush1.msra.mxu0 %v94
    %139 = vmatprep.subr.mxu0 0.0
    %140 = vmatpush1.msra.mxu0 %v95
    %141 = vmatprep.subr.mxu0 0.0
    %142 = vmatpush1.msra.mxu0 %v96
    %143 = vmatprep.subr.mxu0 0.0
    %144 = vmatpush1.msra.mxu0 %v97
    %145 = vmatprep.subr.mxu0 0.0
    %146 = vmatpush1.msra.mxu0 %v98
    %147 = vmatprep.subr.mxu0 0.0
    %148 = vmatpush1.msra.mxu0 %v99
    %149 = vmatprep.subr.mxu0 0.0
    %150 = vmatpush1.msra.mxu0 %v100
    %151 = vmatprep.subr.mxu0 0.0
    %152 = vmatpush1.msra.mxu0 %v101
    %153 = vmatprep.subr.mxu0 0.0
    %154 = vmatpush1.msra.mxu0 %v102
    %155 = vmatprep.subr.mxu0 0.0
    %156 = vmatpush1.msra.mxu0 %v103
    %157 = vmatprep.subr.mxu0 0.0
    %158 = vmatpush1.msra.mxu0 %v104
    %159 = vmatprep.subr.mxu0 0.0
    %160 = vmatpush1.msra.mxu0 %v105
    %161 = vmatprep.subr.mxu0 0.0
    %162 = vmatpush1.msra.mxu0 %v106
    %163 = vmatprep.subr.mxu0 0.0
    %164 = vmatpush1.msra.mxu0 %v107
    %165 = vmatprep.subr.mxu0 0.0
    %166 = vmatpush1.msra.mxu0 %v108
    %167 = vmatprep.subr.mxu0 0.0
    %168 = vmatpush1.msra.mxu0 %v109
    %169 = vmatprep.subr.mxu0 0.0
    %170 = vmatpush1.msra.mxu0 %v110
    %171 = vmatprep.subr.mxu0 0.0
    %172 = vmatpush1.msra.mxu0 %v111
    %173 = vmatprep.subr.mxu0 0.0
    %174 = vmatpush1.msra.mxu0 %v112
    %175 = vmatprep.subr.mxu0 0.0
    %176 = vmatpush1.msra.mxu0 %v113
    %177 = vmatprep.subr.mxu0 0.0
    %178 = vmatpush1.msra.mxu0 %v114
    %179 = vmatprep.subr.mxu0 0.0
    %180 = vmatpush1.msra.mxu0 %v115
    %181 = vmatprep.subr.mxu0 0.0
    %182 = vmatpush1.msra.mxu0 %v116
    %183 = vmatprep.subr.mxu0 0.0
    %184 = vmatpush1.msra.mxu0 %v117
    %185 = vmatprep.subr.mxu0 0.0
    %186 = vmatpush1.msra.mxu0 %v118
    %187 = vmatprep.subr.mxu0 0.0
    %188 = vmatpush1.msra.mxu0 %v119
    %189 = vmatprep.subr.mxu0 0.0
    %190 = vmatpush1.msra.mxu0 %v120
    %191 = vmatprep.subr.mxu0 0.0
    %192 = vmatpush1.msra.mxu0 %v121
    %193 = vmatprep.mubr.f32.mxu0 %v89
    %194 = vmatmul.mubr.f32.gmra.mrb[0].mxu0 %v88
    %v195 = vpop.f32.mrb[0].mxu0
    %v196 = vadd.f32 %v127, %v195
    %v197 = vpop.f32.mrb[0].mxu0
    %198 = vdwg.mxu0
    %v199 = vmax.f32 %v196, 0.0
    %201 = vrot.lane.b32.xlu0 %v199, 96
    %v202 = vpop.permute.xlu0 %201
    %v204 = vmax.f32 %v199, %v202
    %v205 = vld [vmem:[%s3] sm:$0xff]
    %v206 = vld [vmem:[%s3 + $0x8] sm:$0xff]
    %v207 = vld [vmem:[%s3 + $0x10] sm:$0xff]
    %v208 = vld [vmem:[%s3 + $0x18] sm:$0xff]
    %v209 = vld [vmem:[%s4] sm:$0x1]
    %v211 = vlaneseq
    %v212 = vshrl.u32 %v211, 7
    %v213 = vsub.s32 0, %v212
    %v214 = vrot.slane %v209, %v213
    %vm216 = vcmask 261120
    %v218 = vsel %vm216, %v204, 0
    %220 = vmatprep.subr.mxu0 0.0
    %221 = vmatpush1.msra.mxu0 %v205
    %222 = vmatprep.subr.mxu0 0.0
    %223 = vmatpush1.msra.mxu0 %v206
    %224 = vmatprep.subr.mxu0 0.0
    %225 = vmatpush1.msra.mxu0 %v207
    %226 = vmatprep.subr.mxu0 0.0
    %227 = vmatpush1.msra.mxu0 %v208
    %228 = vmatprep.subr.mxu0 0.0
    %229 = vmatpush1.msra.mxu0 0.0
    %230 = vmatprep.subr.mxu0 0.0
    %231 = vmatpush1.msra.mxu0 0.0
    %232 = vmatprep.subr.mxu0 0.0
    %233 = vmatpush1.msra.mxu0 0.0
    %234 = vmatprep.subr.mxu0 0.0
    %235 = vmatpush1.msra.mxu0 0.0
    %236 = vmatprep.subr.mxu0 0.0
    %237 = vmatpush1.msra.mxu0 0.0
    %238 = vmatprep.subr.mxu0 0.0
    %239 = vmatpush1.msra.mxu0 0.0
    %240 = vmatprep.subr.mxu0 0.0
    %241 = vmatpush1.msra.mxu0 0.0
    %242 = vmatprep.subr.mxu0 0.0
    %243 = vmatpush1.msra.mxu0 0.0
    %244 = vmatprep.subr.mxu0 0.0
    %245 = vmatpush1.msra.mxu0 0.0
    %246 = vmatprep.subr.mxu0 0.0
    %247 = vmatpush1.msra.mxu0 0.0
    %248 = vmatprep.subr.mxu0 0.0
    %249 = vmatpush1.msra.mxu0 0.0
    %250 = vmatprep.subr.mxu0 0.0
    %251 = vmatpush1.msra.mxu0 0.0
    %252 = vmatprep.subr.mxu0 0.0
    %253 = vmatpush1.msra.mxu0 0.0
    %254 = vmatprep.subr.mxu0 0.0
    %255 = vmatpush1.msra.mxu0 0.0
    %256 = vmatprep.subr.mxu0 0.0
    %257 = vmatpush1.msra.mxu0 0.0
    %258 = vmatprep.subr.mxu0 0.0
    %259 = vmatpush1.msra.mxu0 0.0
    %260 = vmatprep.subr.mxu0 0.0
    %261 = vmatpush1.msra.mxu0 0.0
    %262 = vmatprep.subr.mxu0 0.0
    %263 = vmatpush1.msra.mxu0 0.0
    %264 = vmatprep.subr.mxu0 0.0
    %265 = vmatpush1.msra.mxu0 0.0
    %266 = vmatprep.subr.mxu0 0.0
    %267 = vmatpush1.msra.mxu0 0.0
    %268 = vmatprep.subr.mxu0 0.0
    %269 = vmatpush1.msra.mxu0 0.0
    %270 = vmatprep.subr.mxu0 0.0
    %271 = vmatpush1.msra.mxu0 0.0
    %272 = vmatprep.subr.mxu0 0.0
    %273 = vmatpush1.msra.mxu0 0.0
    %274 = vmatprep.subr.mxu0 0.0
    %275 = vmatpush1.msra.mxu0 0.0
    %276 = vmatprep.subr.mxu0 0.0
    %277 = vmatpush1.msra.mxu0 0.0
    %278 = vmatprep.subr.mxu0 0.0
    %279 = vmatpush1.msra.mxu0 0.0
    %280 = vmatprep.subr.mxu0 0.0
    %281 = vmatpush1.msra.mxu0 0.0
    %282 = vmatprep.subr.mxu0 0.0
    %283 = vmatpush1.msra.mxu0 0.0
    %284 = vmatprep.mubr.f32.mxu0 0.0
    %285 = vmatmul.mubr.f32.gmra.mrb[0].mxu0 %v218
    %v286 = vpop.f32.mrb[0].mxu0
    %v287 = vadd.f32 %v214, %v286
    %v288 = vpop.f32.mrb[0].mxu0
    %289 = vdwg.mxu0
    %290 = vst.msk [vmem:[#allocation2] sm:$0xff] %vm216, %v287
    // Predicated region
    $region22: #{tpu_custom_call.1} parent=1 // pred_check
      _
    $region23: #{tpu_custom_call.1} parent=1 // pred_check_branch
      %292 = sbr.rel (0) target = $region25
    $region24: #{tpu_custom_call.1} parent=1 // pred_region
      %s294 = ssub.s32 128, 128
      %295 = vsyncadd [#allocation3], %s294
      %s297 = sshll.u32 [#allocation2], 4
      %s298 = int_to_ptr.vmem [resolvable:$true] %s297
      %300 = dma.vmem_to_hbm [thread:$0]  %s298, 128, %s5, [#allocation3]
    $region25: #{tpu_custom_call.1} parent=1 // pred_fallthru
      _
    // Predicated region
    $region26: #{tpu_custom_call.1} parent=1 // pred_check
      _
    $region27: #{tpu_custom_call.1} parent=1 // pred_check_branch
      %302 = sbr.rel (0) target = $region29
    $region28: #{tpu_custom_call.1} parent=1 // pred_region
      %303 = dma.done [#allocation3], 128
    $region29: #{tpu_custom_call.1} parent=1 // pred_fallthru
      _
    %304 = vsyncpa [#allocation3], 1

</llo_original>
